<compile_context>
chip_gen: v7x
topology: tpu7x:2x2x1
jax: 0.10.0
libtpu: 0.0.40
codegen_flags: <defaults>
</compile_context>

<pallas_src>
import functools
import math

import jax
import jax.numpy as jnp
from jax.experimental import pallas as pl
from jax.experimental.pallas import tpu as pltpu


def _make_kernel(use_inter: bool, use_intra: bool):
    """Builds a kernel whose argument list matches the enabled branches."""

    def kernel(*refs):
        idx = 0
        gu_ref = refs[idx]; idx += 1          # (tm, tk)
        xup_ref = refs[idx]; idx += 1         # (tk, F_out_p)
        if use_inter:
            hit_ref = refs[idx]; idx += 1     # (tm, Ni_p)
            xip_ref = refs[idx]; idx += 1     # (Ni_p, F_out_p)
        if use_intra:
            b_ref = refs[idx]; idx += 1       # (tm, F_out_p)
            wb_ref = refs[idx]; idx += 1      # (F_out_p, F_out_p)
        bias_ref = refs[idx]; idx += 1        # (1, F_out_p)
        out_ref = refs[idx]; idx += 1         # (tm, F_out_p)
        acc_ref = refs[idx]; idx += 1         # (tm, F_out_p) f32 scratch

        k = pl.program_id(1)
        nk = pl.num_programs(1)

        @pl.when(k == 0)
        def _():
            acc_ref[...] = jnp.zeros_like(acc_ref)

        # Dominant contraction: stream Gu row-slab x projected features.
        acc_ref[...] += jnp.dot(gu_ref[...], xup_ref[...],
                                preferred_element_type=jnp.float32)

        @pl.when(k == nk - 1)
        def _():
            x = acc_ref[...]
            if use_inter:
                x = x + jnp.dot(hit_ref[...], xip_ref[...],
                                preferred_element_type=jnp.float32)
            if use_intra:
                x = x + jnp.dot(b_ref[...], wb_ref[...],
                                preferred_element_type=jnp.float32)
            x = x + bias_ref[...].astype(jnp.float32)
            out_ref[...] = jnp.maximum(x, 0.0).astype(out_ref.dtype)

    return kernel


def _round_up(x, m):
    return ((x + m - 1) // m) * m


def _pad2(x, rows, cols):
    return jnp.pad(x, ((0, rows - x.shape[0]), (0, cols - x.shape[1])))


def hyperconv_forward(Xu, Gu, Hu, Xi, Gi, Hi, B, params,
                      *, inter=False, intra=True, _intra=True,
                      tm=512, tk=1024, compute_dtype=jnp.float32):
    """JAX/Pallas equivalent of HyperConv.forward. Hu, Gi unused (as in torch)."""
    del Hu, Gi  # unused by the reference forward pass
    Wu, Wi, WB, bias = (params["weight_u"], params["weight_i"],
                        params["WB"], params["bias"])
    use_inter = bool(inter)
    use_intra = bool(intra) and bool(_intra)

    Nu = Xu.shape[0]
    Ni = Xi.shape[0]
    F_out = Wu.shape[1]

    # ---- hoisted cheap projections (negligible FLOPs vs the Gu contraction) ----
    xu_p = jnp.dot(Xu, Wu, preferred_element_type=jnp.float32)        # (Nu, F_out)
    xi_p = (jnp.dot(Xi, Wi, preferred_element_type=jnp.float32)
            if use_inter else None)                                   # (Ni, F_out)

    # ---- padding / tile sizing (lane-dense F_out, (8,128)-aligned tiles) ----
    F_out_p = _round_up(F_out, 128)
    tm_eff = min(tm, _round_up(Nu, 8))          # row tile (multiple of 8)
    tk_eff = min(tk, _round_up(Nu, 128))        # K tile   (multiple of 128)
    Nu_rows_p = _round_up(Nu, tm_eff)
    Nu_cols_p = _round_up(Nu, tk_eff)
    Ni_p = _round_up(Ni, 8) if use_inter else 0

    cd = compute_dtype  # streamed-operand dtype (accumulation stays f32)

    Gu_p = _pad2(Gu, Nu_rows_p, Nu_cols_p).astype(cd)
    xu_pp = _pad2(xu_p, Nu_cols_p, F_out_p).astype(cd)
    bias_p = jnp.pad(bias, (0, F_out_p - F_out)).reshape(1, F_out_p).astype(jnp.float32)

    grid = (Nu_rows_p // tm_eff, Nu_cols_p // tk_eff)

    args = [Gu_p, xu_pp]
    in_specs = [
        pl.BlockSpec((tm_eff, tk_eff), lambda i, k: (i, k)),
        pl.BlockSpec((tk_eff, F_out_p), lambda i, k: (k, 0)),
    ]

    if use_inter:
        # One-time transpose in the wrapper: kernel sees a clean (tm, Ni) row tile.
        HiT_p = _pad2(Hi.T, Nu_rows_p, Ni_p).astype(cd)
        xi_pp = _pad2(xi_p, Ni_p, F_out_p).astype(cd)
        args += [HiT_p, xi_pp]
        in_specs += [
            pl.BlockSpec((tm_eff, Ni_p), lambda i, k: (i, 0)),
            pl.BlockSpec((Ni_p, F_out_p), lambda i, k: (0, 0)),
        ]
        # NOTE: for very large Ni the inter term would also need its own K tiling.

    if use_intra:
        B_p = _pad2(B, Nu_rows_p, F_out_p).astype(cd)
        WB_p = _pad2(WB, F_out_p, F_out_p).astype(cd)
        args += [B_p, WB_p]
        in_specs += [
            pl.BlockSpec((tm_eff, F_out_p), lambda i, k: (i, 0)),
            pl.BlockSpec((F_out_p, F_out_p), lambda i, k: (0, 0)),
        ]

    args += [bias_p]
    in_specs += [pl.BlockSpec((1, F_out_p), lambda i, k: (0, 0))]

    out_specs = pl.BlockSpec((tm_eff, F_out_p), lambda i, k: (i, 0))
    out_shape = jax.ShapeDtypeStruct((Nu_rows_p, F_out_p), jnp.float32)

    # Advisory cost estimate so XLA can overlap the hoisted projections / later ops.
    flops = 2 * Nu_rows_p * Nu_cols_p * F_out_p
    if use_inter:
        flops += 2 * Nu_rows_p * Ni_p * F_out_p
    if use_intra:
        flops += 2 * Nu_rows_p * F_out_p * F_out_p
    bytes_accessed = sum(int(a.size) * a.dtype.itemsize for a in args)
    bytes_accessed += Nu_rows_p * F_out_p * 4  # output writeback
    cost = pl.CostEstimate(flops=flops, transcendentals=0,
                           bytes_accessed=bytes_accessed)

    kernel = _make_kernel(use_inter, use_intra)

    out_padded = pl.pallas_call(
        kernel,
        out_shape=out_shape,
        grid_spec=pltpu.PrefetchScalarGridSpec(
            num_scalar_prefetch=0,
            grid=grid,
            in_specs=in_specs,
            out_specs=out_specs,
            scratch_shapes=[pltpu.VMEM((tm_eff, F_out_p), jnp.float32)],
        ),
        compiler_params=pltpu.CompilerParams(
            dimension_semantics=("parallel", "arbitrary"),
            vmem_limit_bytes=32 * 1024 * 1024,
        ),
        cost_estimate=cost,
    )(*args)

    return out_padded[:Nu, :F_out]


def init_params(key, in_ft, out_ft):
    """Deterministic init matching reset_parameters(): U(-stdv, stdv), stdv=1/sqrt(out_ft)."""
    stdv = 1.0 / math.sqrt(out_ft)
    k1, k2, k3, k4 = jax.random.split(key, 4)
    u = lambda k, shape: jax.random.uniform(k, shape, jnp.float32, -stdv, stdv)
    return {
        "weight_u": u(k1, (in_ft, out_ft)),
        "weight_i": u(k2, (in_ft, out_ft)),
        "WB": u(k3, (out_ft, out_ft)),
        "bias": u(k4, (out_ft,)),
    }


def _reference(Xu, Gu, Hu, Xi, Gi, Hi, B, params, *, inter, intra, _intra):
    Wu, Wi, WB, bias = (params["weight_u"], params["weight_i"],
                        params["WB"], params["bias"])
    X = Gu @ (Xu @ Wu)
    if inter:
        X = X + Hi.T @ (Xi @ Wi)
    if intra and _intra:
        X = X + B @ WB
    X = X + bias
    return jnp.maximum(X, 0.0)


if __name__ == "__main__":
    key = jax.random.PRNGKey(0)
    Nu, Ni = 16, 8          # number of user / item nodes
    in_ft, out_ft = 32, 32  # hidden sizes

    ks = jax.random.split(key, 8)
    Xu = jax.random.normal(ks[0], (Nu, in_ft), jnp.float32)
    Xi = jax.random.normal(ks[1], (Ni, in_ft), jnp.float32)
    Gu = jax.random.normal(ks[2], (Nu, Nu), jnp.float32)
    Gi = jax.random.normal(ks[3], (Ni, Ni), jnp.float32)   # unused by forward
    Hu = jax.random.normal(ks[4], (Nu, Ni), jnp.float32)   # unused by forward
    Hi = jax.random.normal(ks[5], (Ni, Nu), jnp.float32)
    B = jax.random.normal(ks[6], (Nu, out_ft), jnp.float32)
    params = init_params(ks[7], in_ft, out_ft)

    # Exercise every branch: inter=True, intra=True, _intra=True.
    out = hyperconv_forward(Xu, Gu, Hu, Xi, Gi, Hi, B, params,
                            inter=True, intra=True, _intra=True)
    out = jax.block_until_ready(out)
    ref = _reference(Xu, Gu, Hu, Xi, Gi, Hi, B, params,
                     inter=True, intra=True, _intra=True)
    assert out.shape == (Nu, out_ft) and out.dtype == jnp.float32
    assert jnp.allclose(out, ref, atol=1e-4, rtol=1e-4)

    # Disabled-branch path: inter=False, _intra=False (unused operands not DMA'd).
    out2 = hyperconv_forward(Xu, Gu, Hu, Xi, Gi, Hi, B, params,
                             inter=False, intra=True, _intra=False)
    out2 = jax.block_until_ready(out2)
    ref2 = _reference(Xu, Gu, Hu, Xi, Gi, Hi, B, params,
                      inter=False, intra=True, _intra=False)
    assert jnp.allclose(out2, ref2, atol=1e-4, rtol=1e-4)

    print("KERNEL_OK")
</pallas_src>

<mosaic_0001>
module attributes {stable_mosaic.version = 11 : i64} {
  func.func @kernel(%arg0: i32, %arg1: i32, %arg2: memref<16x128xf32, #tpu.memory_space<vmem>>, %arg3: memref<128x128xf32, #tpu.memory_space<vmem>>, %arg4: memref<16x8xf32, #tpu.memory_space<vmem>>, %arg5: memref<8x128xf32, #tpu.memory_space<vmem>>, %arg6: memref<16x128xf32, #tpu.memory_space<vmem>>, %arg7: memref<128x128xf32, #tpu.memory_space<vmem>>, %arg8: memref<1x128xf32, #tpu.memory_space<vmem>>, %arg9: memref<16x128xf32, #tpu.memory_space<vmem>>, %arg10: memref<16x128xf32, #tpu.memory_space<vmem>>) attributes {dimension_semantics = [#tpu.dimension_semantics<parallel>, #tpu.dimension_semantics<arbitrary>], iteration_bounds = array<i64: 1, 1>, scalar_prefetch = 0 : i64, scratch_operands = 1 : i64, tpu.core_type = #tpu.core_type<tc>, window_params = [{transform_indices = @transform_0, window_bounds = array<i64: 16, 128>}, {transform_indices = @transform_1, window_bounds = array<i64: 128, 128>}, {transform_indices = @transform_2, window_bounds = array<i64: 16, 8>}, {pipeline_mode = #tpu.pipeline_mode<synchronous>, transform_indices = @transform_3, window_bounds = array<i64: 8, 128>}, {transform_indices = @transform_4, window_bounds = array<i64: 16, 128>}, {pipeline_mode = #tpu.pipeline_mode<synchronous>, transform_indices = @transform_5, window_bounds = array<i64: 128, 128>}, {pipeline_mode = #tpu.pipeline_mode<synchronous>, transform_indices = @transform_6, window_bounds = array<i64: 1, 128>}, {transform_indices = @transform_7, window_bounds = array<i64: 16, 128>}]} {
    %c0_i32 = arith.constant 0 : i32
    %0 = arith.cmpi eq, %arg1, %c0_i32 : i32
    %1 = arith.extui %0 : i1 to i32
    %c0_i32_0 = arith.constant 0 : i32
    %2 = arith.cmpi ne, %1, %c0_i32_0 : i32
    scf.if %2 {
      %cst_10 = arith.constant 0.000000e+00 : f32
      %12 = vector.broadcast %cst_10 : f32 to vector<16x128xf32>
      %c0_11 = arith.constant 0 : index
      %c0_12 = arith.constant 0 : index
      %13 = vector.load %arg10[%c0_11, %c0_12] : memref<16x128xf32, #tpu.memory_space<vmem>>, vector<16x128xf32>
      tpu.vector_store %arg10[%c0_11, %c0_12], %12 {strides = array<i32>} : memref<16x128xf32, #tpu.memory_space<vmem>>, vector<16x128xf32>,
    } else {
    }
    %c0 = arith.constant 0 : index
    %c0_1 = arith.constant 0 : index
    %3 = vector.load %arg10[%c0, %c0_1] : memref<16x128xf32, #tpu.memory_space<vmem>>, vector<16x128xf32>
    %c0_2 = arith.constant 0 : index
    %c0_3 = arith.constant 0 : index
    %4 = vector.load %arg2[%c0_2, %c0_3] : memref<16x128xf32, #tpu.memory_space<vmem>>, vector<16x128xf32>
    %c0_4 = arith.constant 0 : index
    %c0_5 = arith.constant 0 : index
    %5 = vector.load %arg3[%c0_4, %c0_5] : memref<128x128xf32, #tpu.memory_space<vmem>>, vector<128x128xf32>
    %cst = arith.constant dense<0.000000e+00> : vector<16x128xf32>
    %6 = tpu.matmul %4, %5, %cst {dimension_numbers = #tpu.dot_dimension_numbers<[1], [0], [0], [1], [0, 0, 1, 1], [], []>} : vector<16x128xf32>, vector<128x128xf32>, vector<16x128xf32> -> vector<16x128xf32>
    %7 = arith.addf %3, %6 : vector<16x128xf32>
    %c0_6 = arith.constant 0 : index
    %c0_7 = arith.constant 0 : index
    %8 = vector.load %arg10[%c0_6, %c0_7] : memref<16x128xf32, #tpu.memory_space<vmem>>, vector<16x128xf32>
    tpu.vector_store %arg10[%c0_6, %c0_7], %7 {strides = array<i32>} : memref<16x128xf32, #tpu.memory_space<vmem>>, vector<16x128xf32>,
    %c0_i32_8 = arith.constant 0 : i32
    %9 = arith.cmpi eq, %arg1, %c0_i32_8 : i32
    %10 = arith.extui %9 : i1 to i32
    %c0_i32_9 = arith.constant 0 : i32
    %11 = arith.cmpi ne, %10, %c0_i32_9 : i32
    scf.if %11 {
      %c0_10 = arith.constant 0 : index
      %c0_11 = arith.constant 0 : index
      %12 = vector.load %arg10[%c0_10, %c0_11] : memref<16x128xf32, #tpu.memory_space<vmem>>, vector<16x128xf32>
      %c0_12 = arith.constant 0 : index
      %c0_13 = arith.constant 0 : index
      %13 = vector.load %arg4[%c0_12, %c0_13] : memref<16x8xf32, #tpu.memory_space<vmem>>, vector<16x8xf32>
      %c0_14 = arith.constant 0 : index
      %c0_15 = arith.constant 0 : index
      %14 = vector.load %arg5[%c0_14, %c0_15] : memref<8x128xf32, #tpu.memory_space<vmem>>, vector<8x128xf32>
      %cst_16 = arith.constant dense<0.000000e+00> : vector<16x128xf32>
      %15 = tpu.matmul %13, %14, %cst_16 {dimension_numbers = #tpu.dot_dimension_numbers<[1], [0], [0], [1], [0, 0, 1, 1], [], []>} : vector<16x8xf32>, vector<8x128xf32>, vector<16x128xf32> -> vector<16x128xf32>
      %16 = arith.addf %12, %15 : vector<16x128xf32>
      %c0_17 = arith.constant 0 : index
      %c0_18 = arith.constant 0 : index
      %17 = vector.load %arg6[%c0_17, %c0_18] : memref<16x128xf32, #tpu.memory_space<vmem>>, vector<16x128xf32>
      %c0_19 = arith.constant 0 : index
      %c0_20 = arith.constant 0 : index
      %18 = vector.load %arg7[%c0_19, %c0_20] : memref<128x128xf32, #tpu.memory_space<vmem>>, vector<128x128xf32>
      %cst_21 = arith.constant dense<0.000000e+00> : vector<16x128xf32>
      %19 = tpu.matmul %17, %18, %cst_21 {dimension_numbers = #tpu.dot_dimension_numbers<[1], [0], [0], [1], [0, 0, 1, 1], [], []>} : vector<16x128xf32>, vector<128x128xf32>, vector<16x128xf32> -> vector<16x128xf32>
      %20 = arith.addf %16, %19 : vector<16x128xf32>
      %c0_22 = arith.constant 0 : index
      %c0_23 = arith.constant 0 : index
      %21 = vector.load %arg8[%c0_22, %c0_23] : memref<1x128xf32, #tpu.memory_space<vmem>>, vector<1x128xf32>
      %22 = vector.broadcast %21 : vector<1x128xf32> to vector<16x128xf32>
      %23 = arith.addf %20, %22 : vector<16x128xf32>
      %cst_24 = arith.constant 0.000000e+00 : f32
      %24 = vector.broadcast %cst_24 : f32 to vector<16x128xf32>
      %25 = arith.maximumf %23, %24 : vector<16x128xf32>
      %c0_25 = arith.constant 0 : index
      %c0_26 = arith.constant 0 : index
      %26 = vector.load %arg9[%c0_25, %c0_26] : memref<16x128xf32, #tpu.memory_space<vmem>>, vector<16x128xf32>
      tpu.vector_store %arg9[%c0_25, %c0_26], %25 {strides = array<i32>} : memref<16x128xf32, #tpu.memory_space<vmem>>, vector<16x128xf32>,
    } else {
    }
    return
  }
  func.func @transform_0(%arg0: i32, %arg1: i32) -> (i32, i32) {
    %c0_i32 = arith.constant 0 : i32
    return %arg0, %arg1 : i32, i32
  }
  func.func @transform_1(%arg0: i32, %arg1: i32) -> (i32, i32) {
    %c0_i32 = arith.constant 0 : i32
    %c0_i32_0 = arith.constant 0 : i32
    return %arg1, %c0_i32 : i32, i32
  }
  func.func @transform_2(%arg0: i32, %arg1: i32) -> (i32, i32) {
    %c0_i32 = arith.constant 0 : i32
    %c0_i32_0 = arith.constant 0 : i32
    return %arg0, %c0_i32 : i32, i32
  }
  func.func @transform_3(%arg0: i32, %arg1: i32) -> (i32, i32) {
    %c0_i32 = arith.constant 0 : i32
    %c0_i32_0 = arith.constant 0 : i32
    %c0_i32_1 = arith.constant 0 : i32
    return %c0_i32, %c0_i32_0 : i32, i32
  }
  func.func @transform_4(%arg0: i32, %arg1: i32) -> (i32, i32) {
    %c0_i32 = arith.constant 0 : i32
    %c0_i32_0 = arith.constant 0 : i32
    return %arg0, %c0_i32 : i32, i32
  }
  func.func @transform_5(%arg0: i32, %arg1: i32) -> (i32, i32) {
    %c0_i32 = arith.constant 0 : i32
    %c0_i32_0 = arith.constant 0 : i32
    %c0_i32_1 = arith.constant 0 : i32
    return %c0_i32, %c0_i32_0 : i32, i32
  }
  func.func @transform_6(%arg0: i32, %arg1: i32) -> (i32, i32) {
    %c0_i32 = arith.constant 0 : i32
    %c0_i32_0 = arith.constant 0 : i32
    %c0_i32_1 = arith.constant 0 : i32
    return %c0_i32, %c0_i32_0 : i32, i32
  }
  func.func @transform_7(%arg0: i32, %arg1: i32) -> (i32, i32) {
    %c0_i32 = arith.constant 0 : i32
    %c0_i32_0 = arith.constant 0 : i32
    return %arg0, %c0_i32 : i32, i32
  }
}

</mosaic_0001>

<llo_original>
// kernel: tpu_custom_call.1
$region0: #{tpu_custom_call.1}
  #allocation0 [shape = 'u32[]', space=smem, size = 0x4, offset = 0x4, fixed_abs, tag = 'smem constant byte address 0x4 - core index']
  #allocation1 [shape = 'u32[144,128]{1,0:T(1,128)}', space=vmem, size = 0x12000, scoped, tag = 'internal scratch']
  #allocation2 [shape = 'f32[16,128]{1,0:T(8,128)}', space=vmem, size = 0x2000, scoped, tag = 'scratch operand']
  %s0 = inlined_call_operand.vmem [shape: f32[16,128], index: 0, kind: input, shape index: {}]
  %s1 = inlined_call_operand.hbm [shape: f32[128,128], index: 1, kind: input, shape index: {}]
  %s2 = inlined_call_operand.vmem [shape: f32[16,8], index: 2, kind: input, shape index: {}]
  %s3 = inlined_call_operand.hbm [shape: f32[8,128], index: 3, kind: input, shape index: {}]
  %s4 = inlined_call_operand.vmem [shape: f32[16,128], index: 4, kind: input, shape index: {}]
  %s5 = inlined_call_operand.hbm [shape: f32[128,128], index: 5, kind: input, shape index: {}]
  %s6 = inlined_call_operand.vmem [shape: f32[1,128], index: 6, kind: input, shape index: {}]
  %s7 = inlined_call_operand.hbm [shape: f32[16,128], index: 7, kind: output, shape index: {}]
  %s8 = sld [smem:[#allocation0]]
  $region58: #{tpu_custom_call.1} parent=0
    _
  %s10 = ssub.s32 1, %s8
  %s11 = scalar_select 0, %s10, %s8
  $region1: #{tpu_custom_call.1} parent=0
    #allocation3 [shape = 'u8[65536]{0}', space=vmem, size = 0x10000, scoped, tag = 'input window, operand 1, single buffered']
    #allocation4 [shape = 's32[1]{0}', space=sflag, size = 0x4, scoped, tag = 'scoped memory for tpu_custom_call.1']
    #allocation5 [shape = 's32[1]{0}', space=sflag, size = 0x4, scoped, tag = 'scoped memory for tpu_custom_call.1']
    #allocation6 [shape = 'u8[4096]{0}', space=vmem, size = 0x1000, scoped, tag = 'input window, operand 3, single buffered']
    #allocation7 [shape = 's32[1]{0}', space=sflag, size = 0x4, scoped, tag = 'scoped memory for tpu_custom_call.1']
    #allocation8 [shape = 'u8[65536]{0}', space=vmem, size = 0x10000, scoped, tag = 'input window, operand 5, single buffered']
    #allocation9 [shape = 'u8[8192]{0}', space=vmem, size = 0x2000, scoped, tag = 'output window, operand 0, single buffered']
    %12 = vsyncpa [#allocation4], 0
    %13 = vsyncpa [#allocation7], 0
    %14 = vsyncpa [#allocation5], 0
    // Predicated region
    $region2: #{tpu_custom_call.1} parent=1 // pred_check
      _
    $region3: #{tpu_custom_call.1} parent=1 // pred_check_branch
      %16 = sbr.rel (0) target = $region5
    $region4: #{tpu_custom_call.1} parent=1 // pred_region
      _
    $region5: #{tpu_custom_call.1} parent=1 // pred_fallthru
      _
    // Predicated region
    $region6: #{tpu_custom_call.1} parent=1 // pred_check
      _
    $region7: #{tpu_custom_call.1} parent=1 // pred_check_branch
      %18 = sbr.rel (0) target = $region9
    $region8: #{tpu_custom_call.1} parent=1 // pred_region
      %s20 = ssub.s32 2048, 2048
      %21 = vsyncadd [#allocation4], %s20
      %s22 = sshll.u32 [#allocation3], 4
      %s23 = int_to_ptr.vmem [resolvable:$true] %s22
      %28 = dma.hbm_to_vmem [thread:$0]  %s1, 2048, %s23, [#allocation4], 128, 128, 8
    $region9: #{tpu_custom_call.1} parent=1 // pred_fallthru
      _
    // Predicated region
    $region10: #{tpu_custom_call.1} parent=1 // pred_check
      _
    $region11: #{tpu_custom_call.1} parent=1 // pred_check_branch
      %30 = sbr.rel (0) target = $region13
    $region12: #{tpu_custom_call.1} parent=1 // pred_region
      _
    $region13: #{tpu_custom_call.1} parent=1 // pred_fallthru
      _
    // Predicated region
    $region14: #{tpu_custom_call.1} parent=1 // pred_check
      _
    $region15: #{tpu_custom_call.1} parent=1 // pred_check_branch
      %32 = sbr.rel (0) target = $region17
    $region16: #{tpu_custom_call.1} parent=1 // pred_region
      %s34 = ssub.s32 128, 128
      %35 = vsyncadd [#allocation7], %s34
      %s37 = sshll.u32 [#allocation6], 4
      %s38 = int_to_ptr.vmem [resolvable:$true] %s37
      %40 = dma.hbm_to_vmem [thread:$0]  %s3, 128, %s38, [#allocation7]
    $region17: #{tpu_custom_call.1} parent=1 // pred_fallthru
      _
    // Predicated region
    $region18: #{tpu_custom_call.1} parent=1 // pred_check
      _
    $region19: #{tpu_custom_call.1} parent=1 // pred_check_branch
      %42 = sbr.rel (0) target = $region21
    $region20: #{tpu_custom_call.1} parent=1 // pred_region
      _
    $region21: #{tpu_custom_call.1} parent=1 // pred_fallthru
      _
    // Predicated region
    $region22: #{tpu_custom_call.1} parent=1 // pred_check
      _
    $region23: #{tpu_custom_call.1} parent=1 // pred_check_branch
      %44 = sbr.rel (0) target = $region25
    $region24: #{tpu_custom_call.1} parent=1 // pred_region
      %s46 = ssub.s32 2048, 2048
      %47 = vsyncadd [#allocation7], %s46
      %s48 = sshll.u32 [#allocation8], 4
      %s49 = int_to_ptr.vmem [resolvable:$true] %s48
      %54 = dma.hbm_to_vmem [thread:$0]  %s5, 2048, %s49, [#allocation7], 128, 128, 8
    $region25: #{tpu_custom_call.1} parent=1 // pred_fallthru
      _
    // Predicated region
    $region26: #{tpu_custom_call.1} parent=1 // pred_check
      _
    $region27: #{tpu_custom_call.1} parent=1 // pred_check_branch
      %56 = sbr.rel (0) target = $region29
    $region28: #{tpu_custom_call.1} parent=1 // pred_region
      _
    $region29: #{tpu_custom_call.1} parent=1 // pred_fallthru
      _
    // Predicated region
    $region30: #{tpu_custom_call.1} parent=1 // pred_check
      _
    $region31: #{tpu_custom_call.1} parent=1 // pred_check_branch
      %58 = sbr.rel (0) target = $region33
    $region32: #{tpu_custom_call.1} parent=1 // pred_region
      %59 = dma.done [#allocation4], 2048
    $region33: #{tpu_custom_call.1} parent=1 // pred_fallthru
      _
    // Predicated region
    $region34: #{tpu_custom_call.1} parent=1 // pred_check
      _
    $region35: #{tpu_custom_call.1} parent=1 // pred_check_branch
      %61 = sbr.rel (0) target = $region37
    $region36: #{tpu_custom_call.1} parent=1 // pred_region
      %62 = dma.done [#allocation7], 128
    $region37: #{tpu_custom_call.1} parent=1 // pred_fallthru
      _
    // Predicated region
    $region38: #{tpu_custom_call.1} parent=1 // pred_check
      _
    $region39: #{tpu_custom_call.1} parent=1 // pred_check_branch
      %64 = sbr.rel (0) target = $region41
    $region40: #{tpu_custom_call.1} parent=1 // pred_region
      %65 = dma.done [#allocation7], 2048
    $region41: #{tpu_custom_call.1} parent=1 // pred_fallthru
      _
    %p66 = scmp.eq.s32.totalorder 0, 0
    // Predicated region
    $region42: #{tpu_custom_call.1} parent=1 // pred_check
      %p67 = pneg %p66
    $region43: #{tpu_custom_call.1} parent=1 // pred_check_branch
      %69 = sbr.rel (%p67) target = $region45
    $region44: #{tpu_custom_call.1} parent=1 // pred_region
      %70 = vst [vmem:[#allocation2] sm:$0xff] 0.0
      %71 = vst [vmem:[#allocation2 + $0x8] sm:$0xff] 0.0
    $region45: #{tpu_custom_call.1} parent=1 // pred_fallthru
      _
    %v72 = vld [vmem:[#allocation2] sm:$0xff]
    %v73 = vld [vmem:[#allocation2 + $0x8] sm:$0xff]
    %v74 = vld [vmem:[%s0] sm:$0xff]
    %v75 = vld [vmem:[%s0 + $0x8] sm:$0xff]
    %v76 = vld [vmem:[#allocation3] sm:$0xff]
    %v77 = vld [vmem:[#allocation3 + $0x8] sm:$0xff]
    %v78 = vld [vmem:[#allocation3 + $0x10] sm:$0xff]
    %v79 = vld [vmem:[#allocation3 + $0x18] sm:$0xff]
    %v80 = vld [vmem:[#allocation3 + $0x20] sm:$0xff]
    %v81 = vld [vmem:[#allocation3 + $0x28] sm:$0xff]
    %v82 = vld [vmem:[#allocation3 + $0x30] sm:$0xff]
    %v83 = vld [vmem:[#allocation3 + $0x38] sm:$0xff]
    %v84 = vld [vmem:[#allocation3 + $0x40] sm:$0xff]
    %v85 = vld [vmem:[#allocation3 + $0x48] sm:$0xff]
    %v86 = vld [vmem:[#allocation3 + $0x50] sm:$0xff]
    %v87 = vld [vmem:[#allocation3 + $0x58] sm:$0xff]
    %v88 = vld [vmem:[#allocation3 + $0x60] sm:$0xff]
    %v89 = vld [vmem:[#allocation3 + $0x68] sm:$0xff]
    %v90 = vld [vmem:[#allocation3 + $0x70] sm:$0xff]
    %v91 = vld [vmem:[#allocation3 + $0x78] sm:$0xff]
    %92 = vmatprep.subr.mxu0 0.0
    %93 = vmatpush1.msra.mxu0 %v76
    %94 = vmatprep.subr.mxu0 0.0
    %95 = vmatpush1.msra.mxu0 %v77
    %96 = vmatprep.subr.mxu0 0.0
    %97 = vmatpush1.msra.mxu0 %v78
    %98 = vmatprep.subr.mxu0 0.0
    %99 = vmatpush1.msra.mxu0 %v79
    %100 = vmatprep.subr.mxu0 0.0
    %101 = vmatpush1.msra.mxu0 %v80
    %102 = vmatprep.subr.mxu0 0.0
    %103 = vmatpush1.msra.mxu0 %v81
    %104 = vmatprep.subr.mxu0 0.0
    %105 = vmatpush1.msra.mxu0 %v82
    %106 = vmatprep.subr.mxu0 0.0
    %107 = vmatpush1.msra.mxu0 %v83
    %108 = vmatprep.subr.mxu0 0.0
    %109 = vmatpush1.msra.mxu0 %v84
    %110 = vmatprep.subr.mxu0 0.0
    %111 = vmatpush1.msra.mxu0 %v85
    %112 = vmatprep.subr.mxu0 0.0
    %113 = vmatpush1.msra.mxu0 %v86
    %114 = vmatprep.subr.mxu0 0.0
    %115 = vmatpush1.msra.mxu0 %v87
    %116 = vmatprep.subr.mxu0 0.0
    %117 = vmatpush1.msra.mxu0 %v88
    %118 = vmatprep.subr.mxu0 0.0
    %119 = vmatpush1.msra.mxu0 %v89
    %120 = vmatprep.subr.mxu0 0.0
    %121 = vmatpush1.msra.mxu0 %v90
    %122 = vmatprep.subr.mxu0 0.0
    %123 = vmatpush1.msra.mxu0 %v91
    %124 = vmatprep.subr.mxu0 0.0
    %125 = vmatpush1.msra.mxu0 0.0
    %126 = vmatprep.subr.mxu0 0.0
    %127 = vmatpush1.msra.mxu0 0.0
    %128 = vmatprep.subr.mxu0 0.0
    %129 = vmatpush1.msra.mxu0 0.0
    %130 = vmatprep.subr.mxu0 0.0
    %131 = vmatpush1.msra.mxu0 0.0
    %132 = vmatprep.subr.mxu0 0.0
    %133 = vmatpush1.msra.mxu0 0.0
    %134 = vmatprep.subr.mxu0 0.0
    %135 = vmatpush1.msra.mxu0 0.0
    %136 = vmatprep.subr.mxu0 0.0
    %137 = vmatpush1.msra.mxu0 0.0
    %138 = vmatprep.subr.mxu0 0.0
    %139 = vmatpush1.msra.mxu0 0.0
    %140 = vmatprep.subr.mxu0 0.0
    %141 = vmatpush1.msra.mxu0 0.0
    %142 = vmatprep.subr.mxu0 0.0
    %143 = vmatpush1.msra.mxu0 0.0
    %144 = vmatprep.subr.mxu0 0.0
    %145 = vmatpush1.msra.mxu0 0.0
    %146 = vmatprep.subr.mxu0 0.0
    %147 = vmatpush1.msra.mxu0 0.0
    %148 = vmatprep.subr.mxu0 0.0
    %149 = vmatpush1.msra.mxu0 0.0
    %150 = vmatprep.subr.mxu0 0.0
    %151 = vmatpush1.msra.mxu0 0.0
    %152 = vmatprep.subr.mxu0 0.0
    %153 = vmatpush1.msra.mxu0 0.0
    %154 = vmatprep.subr.mxu0 0.0
    %155 = vmatpush1.msra.mxu0 0.0
    %156 = vmatprep.mubr.f32.mxu0 0.0
    %157 = vmatmul.mubr.f32.gmra.mrb[0].mxu0 %v74
    %v158 = vpop.f32.mrb[0].mxu0
    %v159 = vadd.f32 0.0, %v158
    %v160 = vpop.f32.mrb[0].mxu0
    %161 = vmatprep.mubr.f32.mxu0 0.0
    %162 = vmatmul.mubr.f32.gmra.mrb[0].mxu0 %v75
    %v163 = vpop.f32.mrb[0].mxu0
    %v164 = vadd.f32 0.0, %v163
    %v165 = vpop.f32.mrb[0].mxu0
    %166 = vdwg.mxu0
    %v167 = vadd.f32 %v72, %v159
    %v168 = vadd.f32 %v73, %v164
    %169 = vst [vmem:[#allocation2] sm:$0xff] %v167
    %170 = vst [vmem:[#allocation2 + $0x8] sm:$0xff] %v168
    // Predicated region
    $region46: #{tpu_custom_call.1} parent=1 // pred_check
      %p171 = pneg %p66
    $region47: #{tpu_custom_call.1} parent=1 // pred_check_branch
      %173 = sbr.rel (%p171) target = $region49
    $region48: #{tpu_custom_call.1} parent=1 // pred_region
      %v174 = vld [vmem:[#allocation2] sm:$0xff]
      %v175 = vld [vmem:[#allocation2 + $0x8] sm:$0xff]
      %v176 = vld [vmem:[%s2] sm:$0xff]
      %v177 = vld [vmem:[%s2 + $0x8] sm:$0xff]
      %v178 = vld [vmem:[#allocation6] sm:$0xff]
      %vm179 = vcmask 64512
      %v181 = vsel %vm179, %v176, 0
      %v184 = vsel %vm179, %v177, 0
      %186 = vmatprep.subr.mxu0 0.0
      %187 = vmatpush1.msra.mxu0 %v178
      %188 = vmatprep.subr.mxu0 0.0
      %189 = vmatpush1.msra.mxu0 0.0
      %190 = vmatprep.subr.mxu0 0.0
      %191 = vmatpush1.msra.mxu0 0.0
      %192 = vmatprep.subr.mxu0 0.0
      %193 = vmatpush1.msra.mxu0 0.0
      %194 = vmatprep.subr.mxu0 0.0
      %195 = vmatpush1.msra.mxu0 0.0
      %196 = vmatprep.subr.mxu0 0.0
      %197 = vmatpush1.msra.mxu0 0.0
      %198 = vmatprep.subr.mxu0 0.0
      %199 = vmatpush1.msra.mxu0 0.0
      %200 = vmatprep.subr.mxu0 0.0
      %201 = vmatpush1.msra.mxu0 0.0
      %202 = vmatprep.subr.mxu0 0.0
      %203 = vmatpush1.msra.mxu0 0.0
      %204 = vmatprep.subr.mxu0 0.0
      %205 = vmatpush1.msra.mxu0 0.0
      %206 = vmatprep.subr.mxu0 0.0
      %207 = vmatpush1.msra.mxu0 0.0
      %208 = vmatprep.subr.mxu0 0.0
      %209 = vmatpush1.msra.mxu0 0.0
      %210 = vmatprep.subr.mxu0 0.0
      %211 = vmatpush1.msra.mxu0 0.0
      %212 = vmatprep.subr.mxu0 0.0
      %213 = vmatpush1.msra.mxu0 0.0
      %214 = vmatprep.subr.mxu0 0.0
      %215 = vmatpush1.msra.mxu0 0.0
      %216 = vmatprep.subr.mxu0 0.0
      %217 = vmatpush1.msra.mxu0 0.0
      %218 = vmatprep.subr.mxu0 0.0
      %219 = vmatpush1.msra.mxu0 0.0
      %220 = vmatprep.subr.mxu0 0.0
      %221 = vmatpush1.msra.mxu0 0.0
      %222 = vmatprep.subr.mxu0 0.0
      %223 = vmatpush1.msra.mxu0 0.0
      %224 = vmatprep.subr.mxu0 0.0
      %225 = vmatpush1.msra.mxu0 0.0
      %226 = vmatprep.subr.mxu0 0.0
      %227 = vmatpush1.msra.mxu0 0.0
      %228 = vmatprep.subr.mxu0 0.0
      %229 = vmatpush1.msra.mxu0 0.0
      %230 = vmatprep.subr.mxu0 0.0
      %231 = vmatpush1.msra.mxu0 0.0
      %232 = vmatprep.subr.mxu0 0.0
      %233 = vmatpush1.msra.mxu0 0.0
      %234 = vmatprep.subr.mxu0 0.0
      %235 = vmatpush1.msra.mxu0 0.0
      %236 = vmatprep.subr.mxu0 0.0
      %237 = vmatpush1.msra.mxu0 0.0
      %238 = vmatprep.subr.mxu0 0.0
      %239 = vmatpush1.msra.mxu0 0.0
      %240 = vmatprep.subr.mxu0 0.0
      %241 = vmatpush1.msra.mxu0 0.0
      %242 = vmatprep.subr.mxu0 0.0
      %243 = vmatpush1.msra.mxu0 0.0
      %244 = vmatprep.subr.mxu0 0.0
      %245 = vmatpush1.msra.mxu0 0.0
      %246 = vmatprep.subr.mxu0 0.0
      %247 = vmatpush1.msra.mxu0 0.0
      %248 = vmatprep.subr.mxu0 0.0
      %249 = vmatpush1.msra.mxu0 0.0
      %250 = vmatprep.mubr.f32.mxu0 0.0
      %251 = vmatmul.mubr.f32.gmra.mrb[0].mxu0 %v181
      %v252 = vpop.f32.mrb[0].mxu0
      %v253 = vadd.f32 0.0, %v252
      %v254 = vpop.f32.mrb[0].mxu0
      %255 = vmatprep.mubr.f32.mxu0 0.0
      %256 = vmatmul.mubr.f32.gmra.mrb[0].mxu0 %v184
      %v257 = vpop.f32.mrb[0].mxu0
      %v258 = vadd.f32 0.0, %v257
      %v259 = vpop.f32.mrb[0].mxu0
      %260 = vdwg.mxu0
      %v261 = vadd.f32 %v174, %v253
      %v262 = vadd.f32 %v175, %v258
      %v263 = vld [vmem:[%s4] sm:$0xff]
      %v264 = vld [vmem:[%s4 + $0x8] sm:$0xff]
      %v265 = vld [vmem:[#allocation8] sm:$0xff]
      %v266 = vld [vmem:[#allocation8 + $0x8] sm:$0xff]
      %v267 = vld [vmem:[#allocation8 + $0x10] sm:$0xff]
      %v268 = vld [vmem:[#allocation8 + $0x18] sm:$0xff]
      %v269 = vld [vmem:[#allocation8 + $0x20] sm:$0xff]
      %v270 = vld [vmem:[#allocation8 + $0x28] sm:$0xff]
      %v271 = vld [vmem:[#allocation8 + $0x30] sm:$0xff]
      %v272 = vld [vmem:[#allocation8 + $0x38] sm:$0xff]
      %v273 = vld [vmem:[#allocation8 + $0x40] sm:$0xff]
      %v274 = vld [vmem:[#allocation8 + $0x48] sm:$0xff]
      %v275 = vld [vmem:[#allocation8 + $0x50] sm:$0xff]
      %v276 = vld [vmem:[#allocation8 + $0x58] sm:$0xff]
      %v277 = vld [vmem:[#allocation8 + $0x60] sm:$0xff]
      %v278 = vld [vmem:[#allocation8 + $0x68] sm:$0xff]
      %v279 = vld [vmem:[#allocation8 + $0x70] sm:$0xff]
      %v280 = vld [vmem:[#allocation8 + $0x78] sm:$0xff]
      %281 = vmatprep.subr.mxu0 0.0
      %282 = vmatpush1.msra.mxu0 %v265
      %283 = vmatprep.subr.mxu0 0.0
      %284 = vmatpush1.msra.mxu0 %v266
      %285 = vmatprep.subr.mxu0 0.0
      %286 = vmatpush1.msra.mxu0 %v267
      %287 = vmatprep.subr.mxu0 0.0
      %288 = vmatpush1.msra.mxu0 %v268
      %289 = vmatprep.subr.mxu0 0.0
      %290 = vmatpush1.msra.mxu0 %v269
      %291 = vmatprep.subr.mxu0 0.0
      %292 = vmatpush1.msra.mxu0 %v270
      %293 = vmatprep.subr.mxu0 0.0
      %294 = vmatpush1.msra.mxu0 %v271
      %295 = vmatprep.subr.mxu0 0.0
      %296 = vmatpush1.msra.mxu0 %v272
      %297 = vmatprep.subr.mxu0 0.0
      %298 = vmatpush1.msra.mxu0 %v273
      %299 = vmatprep.subr.mxu0 0.0
      %300 = vmatpush1.msra.mxu0 %v274
      %301 = vmatprep.subr.mxu0 0.0
      %302 = vmatpush1.msra.mxu0 %v275
      %303 = vmatprep.subr.mxu0 0.0
      %304 = vmatpush1.msra.mxu0 %v276
      %305 = vmatprep.subr.mxu0 0.0
      %306 = vmatpush1.msra.mxu0 %v277
      %307 = vmatprep.subr.mxu0 0.0
      %308 = vmatpush1.msra.mxu0 %v278
      %309 = vmatprep.subr.mxu0 0.0
      %310 = vmatpush1.msra.mxu0 %v279
      %311 = vmatprep.subr.mxu0 0.0
      %312 = vmatpush1.msra.mxu0 %v280
      %313 = vmatprep.subr.mxu0 0.0
      %314 = vmatpush1.msra.mxu0 0.0
      %315 = vmatprep.subr.mxu0 0.0
      %316 = vmatpush1.msra.mxu0 0.0
      %317 = vmatprep.subr.mxu0 0.0
      %318 = vmatpush1.msra.mxu0 0.0
      %319 = vmatprep.subr.mxu0 0.0
      %320 = vmatpush1.msra.mxu0 0.0
      %321 = vmatprep.subr.mxu0 0.0
      %322 = vmatpush1.msra.mxu0 0.0
      %323 = vmatprep.subr.mxu0 0.0
      %324 = vmatpush1.msra.mxu0 0.0
      %325 = vmatprep.subr.mxu0 0.0
      %326 = vmatpush1.msra.mxu0 0.0
      %327 = vmatprep.subr.mxu0 0.0
      %328 = vmatpush1.msra.mxu0 0.0
      %329 = vmatprep.subr.mxu0 0.0
      %330 = vmatpush1.msra.mxu0 0.0
      %331 = vmatprep.subr.mxu0 0.0
      %332 = vmatpush1.msra.mxu0 0.0
      %333 = vmatprep.subr.mxu0 0.0
      %334 = vmatpush1.msra.mxu0 0.0
      %335 = vmatprep.subr.mxu0 0.0
      %336 = vmatpush1.msra.mxu0 0.0
      %337 = vmatprep.subr.mxu0 0.0
      %338 = vmatpush1.msra.mxu0 0.0
      %339 = vmatprep.subr.mxu0 0.0
      %340 = vmatpush1.msra.mxu0 0.0
      %341 = vmatprep.subr.mxu0 0.0
      %342 = vmatpush1.msra.mxu0 0.0
      %343 = vmatprep.subr.mxu0 0.0
      %344 = vmatpush1.msra.mxu0 0.0
      %345 = vmatprep.mubr.f32.mxu0 0.0
      %346 = vmatmul.mubr.f32.gmra.mrb[0].mxu0 %v263
      %v347 = vpop.f32.mrb[0].mxu0
      %v348 = vadd.f32 0.0, %v347
      %v349 = vpop.f32.mrb[0].mxu0
      %350 = vmatprep.mubr.f32.mxu0 0.0
      %351 = vmatmul.mubr.f32.gmra.mrb[0].mxu0 %v264
      %v352 = vpop.f32.mrb[0].mxu0
      %v353 = vadd.f32 0.0, %v352
      %v354 = vpop.f32.mrb[0].mxu0
      %355 = vdwg.mxu0
      %v356 = vadd.f32 %v261, %v348
      %v357 = vadd.f32 %v262, %v353
      %v358 = vld [vmem:[%s6] sm:$0x1]
      %v360 = vlaneseq
      %v361 = vshrl.u32 %v360, 7
      %v362 = vsub.s32 0, %v361
      %v363 = vrot.slane %v358, %v362
      %v365 = vadd.f32 %v356, %v363
      %v366 = vadd.f32 %v357, %v363
      %v367 = vmax.f32 %v365, 0.0
      %v368 = vmax.f32 %v366, 0.0
      %369 = vst [vmem:[#allocation9] sm:$0xff] %v367
      %370 = vst [vmem:[#allocation9 + $0x8] sm:$0xff] %v368
    $region49: #{tpu_custom_call.1} parent=1 // pred_fallthru
      _
    // Predicated region
    $region50: #{tpu_custom_call.1} parent=1 // pred_check
      _
    $region51: #{tpu_custom_call.1} parent=1 // pred_check_branch
      %372 = sbr.rel (0) target = $region53
    $region52: #{tpu_custom_call.1} parent=1 // pred_region
      %s374 = ssub.s32 256, 256
      %375 = vsyncadd [#allocation5], %s374
      %s376 = sshll.u32 [#allocation9], 4
      %s377 = int_to_ptr.vmem [resolvable:$true] %s376
      %382 = dma.vmem_to_hbm [thread:$0]  %s377, 256, %s7, [#allocation5], 128, 128, 8
    $region53: #{tpu_custom_call.1} parent=1 // pred_fallthru
      _
    // Predicated region
    $region54: #{tpu_custom_call.1} parent=1 // pred_check
      _
    $region55: #{tpu_custom_call.1} parent=1 // pred_check_branch
      %384 = sbr.rel (0) target = $region57
    $region56: #{tpu_custom_call.1} parent=1 // pred_region
      %385 = dma.done [#allocation5], 256
    $region57: #{tpu_custom_call.1} parent=1 // pred_fallthru
      _
    %386 = vsyncpa [#allocation4], 1
    %387 = vsyncpa [#allocation7], 1
    %388 = vsyncpa [#allocation5], 1

</llo_original>
